<compile_context>
chip_gen: v6e
topology: v6e:2x2x1
jax: 0.10.0
libtpu: 0.0.40
codegen_flags: <defaults>
</compile_context>

<pallas_src>
import jax
import jax.numpy as jnp
from jax.experimental import pallas as pl
from jax.experimental.pallas import tpu as pltpu


def _concat_conv1x1_relu_kernel(a_ref, b_ref, wa_ref, wb_ref, o_ref):
    # a_ref : (1, C, T)   first input tile  (channels x pixels)
    # b_ref : (1, C, T)   second input tile
    # wa_ref: (C, C)      weight slice applied to `a` channels
    # wb_ref: (C, C)      weight slice applied to `b` channels
    # o_ref : (1, C, T)   output tile
    a = a_ref[0]                                                   # (C, T)
    b = b_ref[0]                                                   # (C, T)
    acc = jnp.dot(wa_ref[...], a, preferred_element_type=jnp.float32)
    acc = acc + jnp.dot(wb_ref[...], b, preferred_element_type=jnp.float32)
    o_ref[0] = jnp.maximum(acc, 0.0).astype(o_ref.dtype)


def _pick_hw_tile(hw, c, dtype_bytes=4, vmem_budget=24 << 20):
    """Largest lane-friendly (multiple-of-128) divisor of HW fitting VMEM."""
    if hw % 128 != 0:
        # Full extent is always a legal block shape.
        return hw
    # Per-step VMEM footprint ~ 3 blocks (a, b, out) x double-buffer x C x T.
    max_t = max(128, vmem_budget // (6 * max(c, 1) * dtype_bytes))
    n = hw // 128
    for d in range(n, 0, -1):
        if n % d == 0 and 128 * d <= max_t:
            return 128 * d
    return 128


@jax.jit
def concat_conv_relu(equi_feat, c2e_feat, weight):
    """Concat forward: cat([a, b], dim=1) -> Conv2d(2C, C, 1, bias=False) -> ReLU.

    equi_feat : (N, C, H, W) float32
    c2e_feat  : (N, C, H, W) float32
    weight    : (C, 2C, 1, 1) float32   (PyTorch OIHW)
    returns     (N, C, H, W) float32
    """
    N, C, H, W = equi_feat.shape
    HW = H * W

    # Fuse the channel concat: split the 1x1 conv weight along input channels.
    w2 = weight.reshape(weight.shape[0], weight.shape[1])   # (C, 2C)
    wa = w2[:, :C]                                           # (C, C)
    wb = w2[:, C:]                                           # (C, C)

    # Free trailing-dim reshapes (no transpose, no pad): pixels go on lanes.
    a = equi_feat.reshape(N, C, HW)
    b = c2e_feat.reshape(N, C, HW)

    t_hw = _pick_hw_tile(HW, C, dtype_bytes=equi_feat.dtype.itemsize)

    out = pl.pallas_call(
        _concat_conv1x1_relu_kernel,
        out_shape=jax.ShapeDtypeStruct((N, C, HW), equi_feat.dtype),
        grid_spec=pltpu.PrefetchScalarGridSpec(
            num_scalar_prefetch=0,
            grid=(N, HW // t_hw),
            in_specs=[
                pl.BlockSpec((1, C, t_hw), lambda n, p: (n, 0, p)),
                pl.BlockSpec((1, C, t_hw), lambda n, p: (n, 0, p)),
                pl.BlockSpec((C, C), lambda n, p: (0, 0)),
                pl.BlockSpec((C, C), lambda n, p: (0, 0)),
            ],
            out_specs=pl.BlockSpec((1, C, t_hw), lambda n, p: (n, 0, p)),
        ),
        compiler_params=pltpu.CompilerParams(
            dimension_semantics=("parallel", "parallel"),
        ),
    )(a, b, wa, wb)

    return out.reshape(N, C, H, W)


def _reference(equi_feat, c2e_feat, weight):
    """Pure-JAX reference matching the torch module."""
    x = jnp.concatenate([equi_feat, c2e_feat], axis=1)
    out = jax.lax.conv_general_dilated(
        x, weight,
        window_strides=(1, 1),
        padding="VALID",
        dimension_numbers=("NCHW", "OIHW", "NCHW"),
    )
    return jnp.maximum(out, 0.0)


if __name__ == "__main__":
    key = jax.random.PRNGKey(0)
    k_a, k_b, k_w = jax.random.split(key, 3)

    N, C, H, W = 2, 4, 16, 16

    equi = jax.random.normal(k_a, (N, C, H, W), dtype=jnp.float32)
    c2e = jax.random.normal(k_b, (N, C, H, W), dtype=jnp.float32)

    # Deterministic PyTorch-like uniform init for the 1x1 conv (no bias).
    fan_in = 2 * C * 1 * 1
    bound = 1.0 / jnp.sqrt(fan_in)
    w = jax.random.uniform(k_w, (C, 2 * C, 1, 1), minval=-bound, maxval=bound,
                           dtype=jnp.float32)

    out = concat_conv_relu(equi, c2e, w)
    out = jax.block_until_ready(out)

    ref = _reference(equi, c2e, w)
    assert out.shape == (N, C, H, W)
    assert jnp.allclose(out, ref, atol=1e-5, rtol=1e-5), (
        f"max err {jnp.max(jnp.abs(out - ref))}")

    print("KERNEL_OK")
</pallas_src>

<mosaic_0001>
module attributes {stable_mosaic.version = 11 : i64} {
  func.func @_concat_conv1x1_relu_kernel(%arg0: i32, %arg1: i32, %arg2: memref<1x4x256xf32, #tpu.memory_space<vmem>>, %arg3: memref<1x4x256xf32, #tpu.memory_space<vmem>>, %arg4: memref<4x4xf32, #tpu.memory_space<vmem>>, %arg5: memref<4x4xf32, #tpu.memory_space<vmem>>, %arg6: memref<1x4x256xf32, #tpu.memory_space<vmem>>) attributes {dimension_semantics = [#tpu.dimension_semantics<parallel>, #tpu.dimension_semantics<parallel>], iteration_bounds = array<i64: 2, 1>, scalar_prefetch = 0 : i64, scratch_operands = 0 : i64, tpu.core_type = #tpu.core_type<tc>, window_params = [{transform_indices = @transform_0, window_bounds = array<i64: 1, 4, 256>}, {transform_indices = @transform_1, window_bounds = array<i64: 1, 4, 256>}, {pipeline_mode = #tpu.pipeline_mode<synchronous>, transform_indices = @transform_2, window_bounds = array<i64: 4, 4>}, {pipeline_mode = #tpu.pipeline_mode<synchronous>, transform_indices = @transform_3, window_bounds = array<i64: 4, 4>}, {transform_indices = @transform_4, window_bounds = array<i64: 1, 4, 256>}]} {
    %c0 = arith.constant 0 : index
    %c0_0 = arith.constant 0 : index
    %c0_1 = arith.constant 0 : index
    %0 = vector.load %arg2[%c0, %c0_0, %c0_1] : memref<1x4x256xf32, #tpu.memory_space<vmem>>, vector<1x4x256xf32>
    %1 = vector.shape_cast %0 : vector<1x4x256xf32> to vector<4x256xf32>
    %c0_2 = arith.constant 0 : index
    %c0_3 = arith.constant 0 : index
    %c0_4 = arith.constant 0 : index
    %2 = vector.load %arg3[%c0_2, %c0_3, %c0_4] : memref<1x4x256xf32, #tpu.memory_space<vmem>>, vector<1x4x256xf32>
    %3 = vector.shape_cast %2 : vector<1x4x256xf32> to vector<4x256xf32>
    %c0_5 = arith.constant 0 : index
    %c0_6 = arith.constant 0 : index
    %4 = vector.load %arg4[%c0_5, %c0_6] : memref<4x4xf32, #tpu.memory_space<vmem>>, vector<4x4xf32>
    %cst = arith.constant dense<0.000000e+00> : vector<4x256xf32>
    %5 = tpu.matmul %4, %1, %cst {dimension_numbers = #tpu.dot_dimension_numbers<[1], [0], [0], [1], [0, 0, 1, 1], [], []>} : vector<4x4xf32>, vector<4x256xf32>, vector<4x256xf32> -> vector<4x256xf32>
    %c0_7 = arith.constant 0 : index
    %c0_8 = arith.constant 0 : index
    %6 = vector.load %arg5[%c0_7, %c0_8] : memref<4x4xf32, #tpu.memory_space<vmem>>, vector<4x4xf32>
    %cst_9 = arith.constant dense<0.000000e+00> : vector<4x256xf32>
    %7 = tpu.matmul %6, %3, %cst_9 {dimension_numbers = #tpu.dot_dimension_numbers<[1], [0], [0], [1], [0, 0, 1, 1], [], []>} : vector<4x4xf32>, vector<4x256xf32>, vector<4x256xf32> -> vector<4x256xf32>
    %8 = arith.addf %5, %7 : vector<4x256xf32>
    %cst_10 = arith.constant 0.000000e+00 : f32
    %9 = vector.broadcast %cst_10 : f32 to vector<4x256xf32>
    %10 = arith.maximumf %8, %9 : vector<4x256xf32>
    %c0_11 = arith.constant 0 : index
    %c0_12 = arith.constant 0 : index
    %c0_13 = arith.constant 0 : index
    %11 = vector.load %arg6[%c0_11, %c0_12, %c0_13] : memref<1x4x256xf32, #tpu.memory_space<vmem>>, vector<1x4x256xf32>
    %12 = vector.shape_cast %11 : vector<1x4x256xf32> to vector<4x256xf32>
    %13 = vector.shape_cast %10 : vector<4x256xf32> to vector<1x4x256xf32>
    tpu.vector_store %arg6[%c0_11, %c0_12, %c0_13], %13 {strides = array<i32>} : memref<1x4x256xf32, #tpu.memory_space<vmem>>, vector<1x4x256xf32>,
    return
  }
  func.func @transform_0(%arg0: i32, %arg1: i32) -> (i32, i32, i32) {
    %c0_i32 = arith.constant 0 : i32
    %c0_i32_0 = arith.constant 0 : i32
    return %arg0, %c0_i32, %arg1 : i32, i32, i32
  }
  func.func @transform_1(%arg0: i32, %arg1: i32) -> (i32, i32, i32) {
    %c0_i32 = arith.constant 0 : i32
    %c0_i32_0 = arith.constant 0 : i32
    return %arg0, %c0_i32, %arg1 : i32, i32, i32
  }
  func.func @transform_2(%arg0: i32, %arg1: i32) -> (i32, i32) {
    %c0_i32 = arith.constant 0 : i32
    %c0_i32_0 = arith.constant 0 : i32
    %c0_i32_1 = arith.constant 0 : i32
    return %c0_i32, %c0_i32_0 : i32, i32
  }
  func.func @transform_3(%arg0: i32, %arg1: i32) -> (i32, i32) {
    %c0_i32 = arith.constant 0 : i32
    %c0_i32_0 = arith.constant 0 : i32
    %c0_i32_1 = arith.constant 0 : i32
    return %c0_i32, %c0_i32_0 : i32, i32
  }
  func.func @transform_4(%arg0: i32, %arg1: i32) -> (i32, i32, i32) {
    %c0_i32 = arith.constant 0 : i32
    %c0_i32_0 = arith.constant 0 : i32
    return %arg0, %c0_i32, %arg1 : i32, i32, i32
  }
}

</mosaic_0001>

<llo_original>
// kernel: concat_conv_relu.1
$region0: #{concat_conv_relu.1}
  #allocation0 [shape = 'u32[]', space=smem, size = 0x4, offset = 0x4, fixed_abs, tag = 'smem constant byte address 0x4 - core index']
  #allocation1 [shape = 'u32[144,128]{1,0:T(1,128)}', space=vmem, size = 0x12000, scoped, tag = 'internal scratch']
  %s0 = inlined_call_operand.vmem [shape: f32[2,4,256], index: 0, kind: input, shape index: {}]
  %s1 = inlined_call_operand.vmem [shape: f32[2,4,256], index: 1, kind: input, shape index: {}]
  %s2 = inlined_call_operand.vmem [shape: f32[4,4], index: 2, kind: input, shape index: {}]
  %s3 = inlined_call_operand.vmem [shape: f32[4,4], index: 3, kind: input, shape index: {}]
  %s4 = inlined_call_operand.vmem [shape: f32[2,4,256], index: 4, kind: output, shape index: {}]
  %s5 = sld [smem:[#allocation0]]
  $region49: #{concat_conv_relu.1} parent=0
    _
  %s7 = ssub.s32 1, %s5
  %s8 = scalar_select 0, %s7, %s5
  loop: start=0, step=1, limit=4
  $region2: #{concat_conv_relu.1} parent=0 // loop_pre_header
    _
  $region3: #{concat_conv_relu.1} parent=0 // loop_header
    %s10 = sphi 0, %s14
    %p11 = scmp.ge.s32.totalorder %s10, 4
    %s17 = sphi 0, %s29
    %s18 = sphi 0, %s25
    %s19 = sphi 0, %s17
    %s20 = sphi 0, %s18
    %s21 = sphi 0, %s19
    %s22 = sphi 0, %s20
    %s34 = sphi 0, %s36
    %s37 = sphi 0, %s34
    %s38 = sphi 0, %s37
    %s54 = sphi 0, %s38
    %s62 = sphi 0, %s64
    %s65 = sphi 0, %s62
    %s66 = sphi 0, %s65
    %s82 = sphi 0, %s66
    %s86 = sphi 0, %s86
    %s88 = sphi 0, %s86
    %s89 = sphi 0, %s88
    %s103 = sphi 0, %s89
    %s107 = sphi 0, %s107
    %s109 = sphi 0, %s107
    %s110 = sphi 0, %s109
    %s124 = sphi 0, %s110
    %s132 = sphi 0, %s134
    %s135 = sphi 0, %s132
    %s136 = sphi 0, %s135
    %s152 = sphi 0, %s136
  $region4: #{concat_conv_relu.1} parent=0 // loop_header_branch
    %13 = sbr.rel (%p11) target = $region8
  $region5: #{concat_conv_relu.1} parent=0 // loop_body
    %s15 = ssub.s32 %s10, 1
    %s16 = ssub.s32 %s10, 2
    %s23 = sadd.s32 1, %s18
    %p24 = scmp.ge.s32.totalorder %s23, 1
    %s25 = scalar_select %p24, 0, %s23
    %s26 = sadd.s32 1, %s17
    %s27 = scalar_select %p24, %s26, %s17
    %p28 = scmp.ge.s32.totalorder %s27, 2
    %s29 = scalar_select %p28, 0, %s27
    %s30 = ssub.s32 %s17, %s29
    %s31 = ssub.s32 %s18, %s25
    %s32 = sor.u32 %s30, %s31
    %p33 = scmp.eq.s32.totalorder %s32, 0
    %s35 = sadd.s32 %s34, 1
    %s36 = scalar_select %p33, %s34, %s35
    %p39 = pneg %p33
    %p40 = scmp.eq.s32.totalorder %s10, 1
    %p41 = por %p39, %p40
    %p42 = scmp.ne.s32.totalorder %s34, %s37
    %p43 = scmp.eq.s32.totalorder %s10, 0
    %p44 = por %p42, %p43
    %p45 = scmp.ne.s32.totalorder %s34, %s37
    %p46 = scmp.eq.s32.totalorder %s15, 1
    %p47 = por %p45, %p46
    %p48 = scmp.ne.s32.totalorder %s37, %s38
    %p49 = scmp.eq.s32.totalorder %s15, 0
    %p50 = por %p48, %p49
    %p51 = scmp.ne.s32.totalorder %s37, %s38
    %p52 = scmp.eq.s32.totalorder %s16, 1
    %p53 = por %p51, %p52
    %p55 = scmp.ne.s32.totalorder %s38, %s54
    %p56 = scmp.eq.s32.totalorder %s16, 0
    %p57 = por %p55, %p56
    %s58 = ssub.s32 %s17, %s29
    %s59 = ssub.s32 %s18, %s25
    %s60 = sor.u32 %s58, %s59
    %p61 = scmp.eq.s32.totalorder %s60, 0
    %s63 = sadd.s32 %s62, 1
    %s64 = scalar_select %p61, %s62, %s63
    %p67 = pneg %p61
    %p68 = scmp.eq.s32.totalorder %s10, 1
    %p69 = por %p67, %p68
    %p70 = scmp.ne.s32.totalorder %s62, %s65
    %p71 = scmp.eq.s32.totalorder %s10, 0
    %p72 = por %p70, %p71
    %p73 = scmp.ne.s32.totalorder %s62, %s65
    %p74 = scmp.eq.s32.totalorder %s15, 1
    %p75 = por %p73, %p74
    %p76 = scmp.ne.s32.totalorder %s65, %s66
    %p77 = scmp.eq.s32.totalorder %s15, 0
    %p78 = por %p76, %p77
    %p79 = scmp.ne.s32.totalorder %s65, %s66
    %p80 = scmp.eq.s32.totalorder %s16, 1
    %p81 = por %p79, %p80
    %p83 = scmp.ne.s32.totalorder %s66, %s82
    %p84 = scmp.eq.s32.totalorder %s16, 0
    %p85 = por %p83, %p84
    %s87 = sadd.s32 %s86, 1
    %p90 = scmp.eq.s32.totalorder %s10, 1
    %p91 = scmp.ne.s32.totalorder %s86, %s88
    %p92 = scmp.eq.s32.totalorder %s10, 0
    %p93 = por %p91, %p92
    %p94 = scmp.ne.s32.totalorder %s86, %s88
    %p95 = scmp.eq.s32.totalorder %s15, 1
    %p96 = por %p94, %p95
    %p97 = scmp.ne.s32.totalorder %s88, %s89
    %p98 = scmp.eq.s32.totalorder %s15, 0
    %p99 = por %p97, %p98
    %p100 = scmp.ne.s32.totalorder %s88, %s89
    %p101 = scmp.eq.s32.totalorder %s16, 1
    %p102 = por %p100, %p101
    %p104 = scmp.ne.s32.totalorder %s89, %s103
    %p105 = scmp.eq.s32.totalorder %s16, 0
    %p106 = por %p104, %p105
    %s108 = sadd.s32 %s107, 1
    %p111 = scmp.eq.s32.totalorder %s10, 1
    %p112 = scmp.ne.s32.totalorder %s107, %s109
    %p113 = scmp.eq.s32.totalorder %s10, 0
    %p114 = por %p112, %p113
    %p115 = scmp.ne.s32.totalorder %s107, %s109
    %p116 = scmp.eq.s32.totalorder %s15, 1
    %p117 = por %p115, %p116
    %p118 = scmp.ne.s32.totalorder %s109, %s110
    %p119 = scmp.eq.s32.totalorder %s15, 0
    %p120 = por %p118, %p119
    %p121 = scmp.ne.s32.totalorder %s109, %s110
    %p122 = scmp.eq.s32.totalorder %s16, 1
    %p123 = por %p121, %p122
    %p125 = scmp.ne.s32.totalorder %s110, %s124
    %p126 = scmp.eq.s32.totalorder %s16, 0
    %p127 = por %p125, %p126
    %s128 = ssub.s32 %s17, %s29
    %s129 = ssub.s32 %s18, %s25
    %s130 = sor.u32 %s128, %s129
    %p131 = scmp.eq.s32.totalorder %s130, 0
    %s133 = sadd.s32 %s132, 1
    %s134 = scalar_select %p131, %s132, %s133
    %p137 = pneg %p131
    %p138 = scmp.eq.s32.totalorder %s10, 1
    %p139 = por %p137, %p138
    %p140 = scmp.ne.s32.totalorder %s132, %s135
    %p141 = scmp.eq.s32.totalorder %s10, 0
    %p142 = por %p140, %p141
    %p143 = scmp.ne.s32.totalorder %s132, %s135
    %p144 = scmp.eq.s32.totalorder %s15, 1
    %p145 = por %p143, %p144
    %p146 = scmp.ne.s32.totalorder %s135, %s136
    %p147 = scmp.eq.s32.totalorder %s15, 0
    %p148 = por %p146, %p147
    %p149 = scmp.ne.s32.totalorder %s135, %s136
    %p150 = scmp.eq.s32.totalorder %s16, 1
    %p151 = por %p149, %p150
    %p153 = scmp.ne.s32.totalorder %s136, %s152
    %p154 = scmp.eq.s32.totalorder %s16, 0
    %p155 = por %p153, %p154
    %p156 = scmp.le.s32.totalorder 1, %s10
    %p157 = scmp.lt.s32.totalorder %s10, 3
    %p158 = pnand %p156, %p157
    %p159 = pneg %p158
    // Predicated region
    $region9: #{concat_conv_relu.1} parent=5 // pred_check
      _
    $region10: #{concat_conv_relu.1} parent=5 // pred_check_branch
      %161 = sbr.rel (%p158) target = $region12
    $region11: #{concat_conv_relu.1} parent=5 // pred_region
      %s162 = ssub.s32 %s10, 1
      // Predicated region
      $region13: #{concat_conv_relu.1} parent=11 // pred_check
        %p163 = pneg %p99
      $region14: #{concat_conv_relu.1} parent=11 // pred_check_branch
        %165 = sbr.rel (%p163) target = $region16
      $region15: #{concat_conv_relu.1} parent=11 // pred_region
        _
      $region16: #{concat_conv_relu.1} parent=11 // pred_fallthru
        _
      // Predicated region
      $region17: #{concat_conv_relu.1} parent=11 // pred_check
        %p166 = pneg %p120
      $region18: #{concat_conv_relu.1} parent=11 // pred_check_branch
        %168 = sbr.rel (%p166) target = $region20
      $region19: #{concat_conv_relu.1} parent=11 // pred_region
        _
      $region20: #{concat_conv_relu.1} parent=11 // pred_fallthru
        _
    $region12: #{concat_conv_relu.1} parent=5 // pred_fallthru
      _
    %p169 = scmp.lt.s32.totalorder %s10, 2
    // Predicated region
    $region21: #{concat_conv_relu.1} parent=5 // pred_check
      %p170 = pneg %p169
    $region22: #{concat_conv_relu.1} parent=5 // pred_check_branch
      %172 = sbr.rel (%p170) target = $region24
    $region23: #{concat_conv_relu.1} parent=5 // pred_region
      // Predicated region
      $region25: #{concat_conv_relu.1} parent=23 // pred_check
        %p173 = pneg %p44
      $region26: #{concat_conv_relu.1} parent=23 // pred_check_branch
        %175 = sbr.rel (%p173) target = $region28
      $region27: #{concat_conv_relu.1} parent=23 // pred_region
        %s176 = smul.u32 2, %s18
        %p177 = scmp.lt.s32.totalorder %s17, 1
        %s178 = scalar_select %p177, %s17, 1
        %p179 = scmp.lt.s32.totalorder %s176, 1
        %s180 = scalar_select %p179, %s176, 1
        %s181 = smul.addr %s178, 2
        %s182 = sadd.s32 %s180, %s181
        %s183 = smul.addr %s182, 4
        %s184 = scalar_lea.vmem %s0, %s183
        %s185 = smul.u32 2, %s18
      $region28: #{concat_conv_relu.1} parent=23 // pred_fallthru
        _
      // Predicated region
      $region29: #{concat_conv_relu.1} parent=23 // pred_check
        %p186 = pneg %p72
      $region30: #{concat_conv_relu.1} parent=23 // pred_check_branch
        %188 = sbr.rel (%p186) target = $region32
      $region31: #{concat_conv_relu.1} parent=23 // pred_region
        %s189 = smul.u32 2, %s18
        %p190 = scmp.lt.s32.totalorder %s17, 1
        %s191 = scalar_select %p190, %s17, 1
        %p192 = scmp.lt.s32.totalorder %s189, 1
        %s193 = scalar_select %p192, %s189, 1
        %s194 = smul.addr %s191, 2
        %s195 = sadd.s32 %s193, %s194
        %s196 = smul.addr %s195, 4
        %s197 = scalar_lea.vmem %s1, %s196
        %s198 = smul.u32 2, %s18
      $region32: #{concat_conv_relu.1} parent=23 // pred_fallthru
        _
    $region24: #{concat_conv_relu.1} parent=5 // pred_fallthru
      _
    %p199 = scmp.le.s32.totalorder 1, %s10
    %p200 = scmp.lt.s32.totalorder %s10, 3
    %p201 = pnand %p199, %p200
    %p202 = pneg %p201
    // Predicated region
    $region33: #{concat_conv_relu.1} parent=5 // pred_check
      _
    $region34: #{concat_conv_relu.1} parent=5 // pred_check_branch
      %204 = sbr.rel (%p201) target = $region36
    $region35: #{concat_conv_relu.1} parent=5 // pred_region
      %s205 = ssub.s32 %s10, 1
      %s206 = smul.u32 2, %s20
      %p207 = scmp.lt.s32.totalorder %s19, 1
      %s208 = scalar_select %p207, %s19, 1
      %p209 = scmp.lt.s32.totalorder %s206, 1
      %s210 = scalar_select %p209, %s206, 1
      %s211 = smul.addr %s208, 2
      %s212 = sadd.s32 %s210, %s211
      %s213 = smul.addr %s212, 4
      %s214 = scalar_lea.vmem %s0, %s213
      %p215 = pneg %p50
      %p216 = pneg %p47
      %s217 = smul.u32 2, %s20
      %p218 = scmp.lt.s32.totalorder %s19, 1
      %s219 = scalar_select %p218, %s19, 1
      %p220 = scmp.lt.s32.totalorder %s217, 1
      %s221 = scalar_select %p220, %s217, 1
      %s222 = smul.addr %s219, 2
      %s223 = sadd.s32 %s221, %s222
      %s224 = smul.addr %s223, 4
      %s225 = scalar_lea.vmem %s1, %s224
      %p226 = pneg %p78
      %p227 = pneg %p75
      %p228 = pneg %p99
      %p229 = pneg %p96
      %p230 = pneg %p120
      %p231 = pneg %p117
      %p232 = pneg %p148
      %p233 = pneg %p145
      %s234 = smul.u32 2, %s20
      %p235 = scmp.lt.s32.totalorder %s19, 1
      %s236 = scalar_select %p235, %s19, 1
      %p237 = scmp.lt.s32.totalorder %s234, 1
      %s238 = scalar_select %p237, %s234, 1
      %s239 = smul.addr %s236, 2
      %s240 = sadd.s32 %s238, %s239
      %s241 = smul.addr %s240, 4
      %s242 = scalar_lea.vmem %s4, %s241
      %s243 = smul.u32 2, %s20
      %p244 = scmp.lt.s32.totalorder %s19, 1
      %s245 = scalar_select %p244, %s19, 1
      %p246 = scmp.lt.s32.totalorder %s243, 1
      %s247 = scalar_select %p246, %s243, 1
      %s248 = smul.addr %s245, 2
      %s249 = sadd.s32 %s247, %s248
      %s250 = smul.addr %s249, 4
      %s251 = scalar_lea.vmem %s0, %s250
      %s252 = smul.u32 2, %s20
      %s253 = smul.u32 2, %s20
      %p254 = scmp.lt.s32.totalorder %s19, 1
      %s255 = scalar_select %p254, %s19, 1
      %p256 = scmp.lt.s32.totalorder %s253, 1
      %s257 = scalar_select %p256, %s253, 1
      %s258 = smul.addr %s255, 2
      %s259 = sadd.s32 %s257, %s258
      %s260 = smul.addr %s259, 4
      %s261 = scalar_lea.vmem %s1, %s260
      %s262 = smul.u32 2, %s20
      %s263 = smul.u32 2, %s20
      %p264 = scmp.lt.s32.totalorder %s19, 1
      %s265 = scalar_select %p264, %s19, 1
      %p266 = scmp.lt.s32.totalorder %s263, 1
      %s267 = scalar_select %p266, %s263, 1
      %s268 = smul.addr %s265, 2
      %s269 = sadd.s32 %s267, %s268
      %s270 = smul.addr %s269, 4
      %s271 = scalar_lea.vmem %s4, %s270
      %s272 = smul.u32 2, %s20
      %v273 = vld [vmem:[%s251] sm:$0xff]
      %v274 = vld [vmem:[%s261] sm:$0xff]
      %v275 = vld [vmem:[%s2] sm:$0xf]
      %v276 = vld [vmem:[%s3] sm:$0xf]
      %v278 = vcombine.high %v274, %v274
      %vm279 = vcmask 31744
      %v281 = vsel %vm279, %v276, 0
      %vm283 = vcmask 1043456
      %v284 = vsel %vm283, %v274, 0
      %v286 = vsel %vm283, %v278, 0
      %288 = vmatprep.subr.mxu0 0.0
      %289 = vmatpush1.msra.mxu0 0.0
      %290 = vmatprep.subr.mxu0 0.0
      %291 = vmatpush1.msra.mxu0 0.0
      %292 = vmatprep.subr.mxu0 0.0
      %293 = vmatpush1.msra.mxu0 0.0
      %294 = vmatprep.subr.mxu0 0.0
      %295 = vmatpush1.msra.mxu0 0.0
      %296 = vmatprep.subr.mxu0 0.0
      %297 = vmatpush1.msra.mxu0 0.0
      %298 = vmatprep.subr.mxu0 0.0
      %299 = vmatpush1.msra.mxu0 0.0
      %300 = vmatprep.subr.mxu0 0.0
      %301 = vmatpush1.msra.mxu0 0.0
      %302 = vmatprep.subr.mxu0 0.0
      %303 = vmatpush1.msra.mxu0 0.0
      %304 = vmatprep.subr.mxu0 0.0
      %305 = vmatpush1.msra.mxu0 0.0
      %306 = vmatprep.subr.mxu0 0.0
      %307 = vmatpush1.msra.mxu0 0.0
      %308 = vmatprep.subr.mxu0 0.0
      %309 = vmatpush1.msra.mxu0 0.0
      %310 = vmatprep.subr.mxu0 0.0
      %311 = vmatpush1.msra.mxu0 0.0
      %312 = vmatprep.subr.mxu0 0.0
      %313 = vmatpush1.msra.mxu0 0.0
      %314 = vmatprep.subr.mxu0 0.0
      %315 = vmatpush1.msra.mxu0 0.0
      %316 = vmatprep.subr.mxu0 0.0
      %317 = vmatpush1.msra.mxu0 0.0
      %318 = vmatprep.subr.mxu0 %v286
      %319 = vmatpush1.msra.mxu0 %v284
      %320 = vmatprep.subr.mxu0 0.0
      %321 = vmatpush2.msra.mxu0 0.0
      %322 = vmatprep.subr.mxu0 0.0
      %323 = vmatpush2.msra.mxu0 0.0
      %324 = vmatprep.subr.mxu0 0.0
      %325 = vmatpush2.msra.mxu0 0.0
      %326 = vmatprep.subr.mxu0 0.0
      %327 = vmatpush2.msra.mxu0 0.0
      %328 = vmatprep.subr.mxu0 0.0
      %329 = vmatpush2.msra.mxu0 0.0
      %330 = vmatprep.subr.mxu0 0.0
      %331 = vmatpush2.msra.mxu0 0.0
      %332 = vmatprep.subr.mxu0 0.0
      %333 = vmatpush2.msra.mxu0 0.0
      %334 = vmatprep.subr.mxu0 0.0
      %335 = vmatpush2.msra.mxu0 0.0
      %336 = vmatprep.subr.mxu0 0.0
      %337 = vmatpush2.msra.mxu0 0.0
      %338 = vmatprep.subr.mxu0 0.0
      %339 = vmatpush2.msra.mxu0 0.0
      %340 = vmatprep.subr.mxu0 0.0
      %341 = vmatpush2.msra.mxu0 0.0
      %342 = vmatprep.subr.mxu0 0.0
      %343 = vmatpush2.msra.mxu0 0.0
      %344 = vmatprep.subr.mxu0 0.0
      %345 = vmatpush2.msra.mxu0 0.0
      %346 = vmatprep.subr.mxu0 0.0
      %347 = vmatpush2.msra.mxu0 0.0
      %348 = vmatprep.subr.mxu0 0.0
      %349 = vmatpush2.msra.mxu0 0.0
      %350 = vmatprep.subr.mxu0 0.0
      %351 = vmatpush2.msra.mxu0 0.0
      %352 = vmatprep.mubr.f32.mxu0 0.0
      %353 = vmatmul.mubr.f32.gmra.mxu0 %v281
      %v354 = vpop.f32.mrf.mxu0
      %v355 = vadd.f32 0.0, %v354
      %v356 = vpop.f32.mrf.mxu0
      %v357 = vadd.f32 0.0, %v356
      %358 = vdwg.mxu0
      %v360 = vcombine.high %v273, %v273
      %v362 = vsel %vm279, %v275, 0
      %v364 = vsel %vm283, %v273, 0
      %v366 = vsel %vm283, %v360, 0
      %368 = vmatprep.subr.mxu0 0.0
      %369 = vmatpush1.msra.mxu0 0.0
      %370 = vmatprep.subr.mxu0 0.0
      %371 = vmatpush1.msra.mxu0 0.0
      %372 = vmatprep.subr.mxu0 0.0
      %373 = vmatpush1.msra.mxu0 0.0
      %374 = vmatprep.subr.mxu0 0.0
      %375 = vmatpush1.msra.mxu0 0.0
      %376 = vmatprep.subr.mxu0 0.0
      %377 = vmatpush1.msra.mxu0 0.0
      %378 = vmatprep.subr.mxu0 0.0
      %379 = vmatpush1.msra.mxu0 0.0
      %380 = vmatprep.subr.mxu0 0.0
      %381 = vmatpush1.msra.mxu0 0.0
      %382 = vmatprep.subr.mxu0 0.0
      %383 = vmatpush1.msra.mxu0 0.0
      %384 = vmatprep.subr.mxu0 0.0
      %385 = vmatpush1.msra.mxu0 0.0
      %386 = vmatprep.subr.mxu0 0.0
      %387 = vmatpush1.msra.mxu0 0.0
      %388 = vmatprep.subr.mxu0 0.0
      %389 = vmatpush1.msra.mxu0 0.0
      %390 = vmatprep.subr.mxu0 0.0
      %391 = vmatpush1.msra.mxu0 0.0
      %392 = vmatprep.subr.mxu0 0.0
      %393 = vmatpush1.msra.mxu0 0.0
      %394 = vmatprep.subr.mxu0 0.0
      %395 = vmatpush1.msra.mxu0 0.0
      %396 = vmatprep.subr.mxu0 0.0
      %397 = vmatpush1.msra.mxu0 0.0
      %398 = vmatprep.subr.mxu0 %v366
      %399 = vmatpush1.msra.mxu0 %v364
      %400 = vmatprep.subr.mxu0 0.0
      %401 = vmatpush2.msra.mxu0 0.0
      %402 = vmatprep.subr.mxu0 0.0
      %403 = vmatpush2.msra.mxu0 0.0
      %404 = vmatprep.subr.mxu0 0.0
      %405 = vmatpush2.msra.mxu0 0.0
      %406 = vmatprep.subr.mxu0 0.0
      %407 = vmatpush2.msra.mxu0 0.0
      %408 = vmatprep.subr.mxu0 0.0
      %409 = vmatpush2.msra.mxu0 0.0
      %410 = vmatprep.subr.mxu0 0.0
      %411 = vmatpush2.msra.mxu0 0.0
      %412 = vmatprep.subr.mxu0 0.0
      %413 = vmatpush2.msra.mxu0 0.0
      %414 = vmatprep.subr.mxu0 0.0
      %415 = vmatpush2.msra.mxu0 0.0
      %416 = vmatprep.subr.mxu0 0.0
      %417 = vmatpush2.msra.mxu0 0.0
      %418 = vmatprep.subr.mxu0 0.0
      %419 = vmatpush2.msra.mxu0 0.0
      %420 = vmatprep.subr.mxu0 0.0
      %421 = vmatpush2.msra.mxu0 0.0
      %422 = vmatprep.subr.mxu0 0.0
      %423 = vmatpush2.msra.mxu0 0.0
      %424 = vmatprep.subr.mxu0 0.0
      %425 = vmatpush2.msra.mxu0 0.0
      %426 = vmatprep.subr.mxu0 0.0
      %427 = vmatpush2.msra.mxu0 0.0
      %428 = vmatprep.subr.mxu0 0.0
      %429 = vmatpush2.msra.mxu0 0.0
      %430 = vmatprep.subr.mxu0 0.0
      %431 = vmatpush2.msra.mxu0 0.0
      %432 = vmatprep.mubr.f32.mxu0 0.0
      %433 = vmatmul.mubr.f32.gmra.mxu0 %v362
      %v434 = vpop.f32.mrf.mxu0
      %v435 = vadd.f32 %v355, %v434
      %v436 = vpop.f32.mrf.mxu0
      %v437 = vadd.f32 %v357, %v436
      %438 = vdwg.mxu0
      %v439 = vmax.f32 %v435, 0.0
      %v440 = vmax.f32 %v437, 0.0
      %v443 = vcombine.low %v439, %v440
      %445 = vst [vmem:[%s271] sm:$0xff] %v443
      %s446 = smul.u32 2, %s20
      %p447 = scmp.lt.s32.totalorder %s19, 1
      %s448 = scalar_select %p447, %s19, 1
      %p449 = scmp.lt.s32.totalorder %s446, 1
      %s450 = scalar_select %p449, %s446, 1
      %s451 = smul.addr %s448, 2
      %s452 = sadd.s32 %s450, %s451
      %s453 = smul.addr %s452, 4
      %s454 = scalar_lea.vmem %s4, %s453
      // Predicated region
      $region37: #{concat_conv_relu.1} parent=35 // pred_check
        %p455 = pneg %p145
      $region38: #{concat_conv_relu.1} parent=35 // pred_check_branch
        %457 = sbr.rel (%p455) target = $region40
      $region39: #{concat_conv_relu.1} parent=35 // pred_region
        %s458 = smul.u32 2, %s20
      $region40: #{concat_conv_relu.1} parent=35 // pred_fallthru
        _
    $region36: #{concat_conv_relu.1} parent=5 // pred_fallthru
      _
    %p459 = scmp.le.s32.totalorder 2, %s10
    // Predicated region
    $region41: #{concat_conv_relu.1} parent=5 // pred_check
      %p460 = pneg %p459
    $region42: #{concat_conv_relu.1} parent=5 // pred_check_branch
      %462 = sbr.rel (%p460) target = $region44
    $region43: #{concat_conv_relu.1} parent=5 // pred_region
      %s463 = ssub.s32 %s10, 2
      // Predicated region
      $region45: #{concat_conv_relu.1} parent=43 // pred_check
        %p464 = pneg %p151
      $region46: #{concat_conv_relu.1} parent=43 // pred_check_branch
        %466 = sbr.rel (%p464) target = $region48
      $region47: #{concat_conv_relu.1} parent=43 // pred_region
        %s467 = smul.u32 2, %s22
        %p468 = scmp.lt.s32.totalorder %s21, 1
        %s469 = scalar_select %p468, %s21, 1
        %p470 = scmp.lt.s32.totalorder %s467, 1
        %s471 = scalar_select %p470, %s467, 1
        %s472 = smul.addr %s469, 2
        %s473 = sadd.s32 %s471, %s472
        %s474 = smul.addr %s473, 4
        %s475 = scalar_lea.vmem %s4, %s474
      $region48: #{concat_conv_relu.1} parent=43 // pred_fallthru
        _
    $region44: #{concat_conv_relu.1} parent=5 // pred_fallthru
      _
  $region6: #{concat_conv_relu.1} parent=0 // loop_footer
    %s14 = sadd.s32 1, %s10
  $region7: #{concat_conv_relu.1} parent=0 // loop_footer_branch
    %9 = sbr.rel target = $region3
  $region8: #{concat_conv_relu.1} parent=0 // loop_exit
    _

</llo_original>
